<compile_context>
chip_gen: v5e
topology: v5e:2x2
jax: 0.10.0
libtpu: 0.0.40
codegen_flags: <defaults>
</compile_context>

<pallas_src>
import jax
import jax.numpy as jnp
import numpy as np
from jax.experimental import pallas as pl
from jax.experimental.pallas import tpu as pltpu

B, N, K = 2, 6, 2  # N == Linear out_features, K == Linear in_features


def _fused_linear_permute_kernel(x_ref, c_ref, d_ref, o_ref):
    # x_ref: (tile_B, N*N*K)   flattened input rows
    # c_ref: (N*N*K, N*N*N)    fused constant matrix (linear + permute/add chain)
    # d_ref: (1, N*N*N)        fused bias table d[a,b,c] = bias[c] + 6*bias[b]
    # o_ref: (tile_B, N*N*N)   flattened v17 rows (lane-dense)
    o_ref[...] = (
        jnp.dot(x_ref[...], c_ref[...], preferred_element_type=jnp.float32)
        + d_ref[...].astype(jnp.float32)
    ).astype(o_ref.dtype)


def model_forward(x, weight, bias, *, batch_tile=512):
    bsz, n1, n2, k = x.shape
    out_features, in_features = weight.shape
    # The permute/add chain is only broadcast-valid when the trailing dims of
    # v1 all equal out_features; fail loudly on any other shape.
    assert n1 == n2 == out_features, (n1, n2, out_features)
    assert k == in_features and bias.shape == (out_features,), (k, weight.shape, bias.shape)

    nf_in = n1 * n2 * k               # 72
    nf_out = n1 * n2 * out_features   # 216

    # Build the fused constant operands in the wrapper.  The einsums below are
    # pure outer products (no contraction), hence exact in f32.
    w = weight.astype(jnp.float32)
    b = bias.astype(jnp.float32)
    eye = jnp.eye(out_features, dtype=jnp.float32)
    # C[(i,j,k),(a,b,c)] = coefficient of x[i,j,k] in v17[a,b,c]
    c6 = (jnp.einsum('ib,ja,ck->ijkabc', eye, eye, w)          # v1[b,a,c]
          + 5.0 * jnp.einsum('ic,ja,bk->ijkabc', eye, eye, w)  # 5*v1[c,a,b]
          + jnp.einsum('ia,jc,bk->ijkabc', eye, eye, w))       # v1[a,c,b]
    C = c6.reshape(nf_in, nf_out).astype(x.dtype)
    d = jnp.broadcast_to(6.0 * b[None, :, None] + b[None, None, :],
                         (out_features, out_features, out_features)
                         ).reshape(1, nf_out).astype(x.dtype)

    x2d = x.reshape(bsz, nf_in)

    if bsz > batch_tile and bsz % batch_tile == 0 and batch_tile % 8 == 0:
        # Large-batch path: parallel batch grid (v7x can split it across its
        # two TensorCores); C and d are broadcast to every grid step.
        out2d = pl.pallas_call(
            _fused_linear_permute_kernel,
            out_shape=jax.ShapeDtypeStruct((bsz, nf_out), x.dtype),
            grid=(bsz // batch_tile,),
            in_specs=[pl.BlockSpec((batch_tile, nf_in), lambda i: (i, 0)),
                      pl.BlockSpec((nf_in, nf_out), lambda i: (0, 0)),
                      pl.BlockSpec((1, nf_out), lambda i: (0, 0))],
            out_specs=pl.BlockSpec((batch_tile, nf_out), lambda i: (i, 0)),
            compiler_params=pltpu.CompilerParams(
                dimension_semantics=("parallel",)),
        )(x2d, C, d)
    else:
        # Micro-batch path: single gridless invocation, whole arrays resident
        # in VMEM (total footprint < 100 KiB); launch overhead dominates.
        out2d = pl.pallas_call(
            _fused_linear_permute_kernel,
            out_shape=jax.ShapeDtypeStruct((bsz, nf_out), x.dtype),
            in_specs=[pl.BlockSpec(memory_space=pltpu.MemorySpace.VMEM)] * 3,
            out_specs=pl.BlockSpec(memory_space=pltpu.MemorySpace.VMEM),
        )(x2d, C, d)

    return out2d.reshape(bsz, n1, n2, out_features)


def reference_forward_np(x, weight, bias):
    # float64 numpy mirror of the torch forward (dead ops removed; returns v17).
    x = np.asarray(x, np.float64)
    w = np.asarray(weight, np.float64)
    b = np.asarray(bias, np.float64)
    v1 = np.einsum('bijk,ok->bijo', x, w) + b
    v2 = np.transpose(v1, (0, 1, 3, 2))
    v3 = np.transpose(v2, (0, 2, 3, 1))
    v4 = v1 + v3
    v5 = v4 + v3
    v6 = v5 + v3
    v8 = v6 + v3
    v9 = np.transpose(v1, (0, 3, 1, 2))
    v10 = v3 + v9
    v15 = np.transpose(v10, (0, 1, 3, 2))
    v16 = v8 + v15
    v17 = np.transpose(v16, (0, 2, 1, 3))
    return v17


if __name__ == "__main__":
    key = jax.random.PRNGKey(0)
    kx, kw, kb = jax.random.split(key, 3)

    x1 = jax.random.normal(kx, (B, N, N, K), dtype=jnp.float32)
    # Deterministic Linear(2, 6) parameters (torch-style uniform init bound).
    bound = 1.0 / np.sqrt(K)
    weight = jax.random.uniform(kw, (N, K), jnp.float32, -bound, bound)
    bias = jax.random.uniform(kb, (N,), jnp.float32, -bound, bound)

    out = jax.block_until_ready(model_forward(x1, weight, bias))
    ref = reference_forward_np(x1, weight, bias)

    assert out.shape == (B, N, N, N), out.shape
    assert np.allclose(np.asarray(out, np.float64), ref, atol=1e-4, rtol=1e-4)
    print("KERNEL_OK")
</pallas_src>

<mosaic_0001>
module attributes {stable_mosaic.version = 11 : i64} {
  func.func @_fused_linear_permute_kernel(%arg0: memref<2x72xf32, #tpu.memory_space<vmem>>, %arg1: memref<72x216xf32, #tpu.memory_space<vmem>>, %arg2: memref<1x216xf32, #tpu.memory_space<vmem>>, %arg3: memref<2x216xf32, #tpu.memory_space<vmem>>) attributes {dimension_semantics = [], scalar_prefetch = 0 : i64, scratch_operands = 0 : i64, tpu.core_type = #tpu.core_type<tc>} {
    %c0 = arith.constant 0 : index
    %c0_0 = arith.constant 0 : index
    %0 = vector.load %arg0[%c0, %c0_0] : memref<2x72xf32, #tpu.memory_space<vmem>>, vector<2x72xf32>
    %c0_1 = arith.constant 0 : index
    %c0_2 = arith.constant 0 : index
    %1 = vector.load %arg1[%c0_1, %c0_2] : memref<72x216xf32, #tpu.memory_space<vmem>>, vector<72x216xf32>
    %cst = arith.constant dense<0.000000e+00> : vector<2x216xf32>
    %2 = tpu.matmul %0, %1, %cst {dimension_numbers = #tpu.dot_dimension_numbers<[1], [0], [0], [1], [0, 0, 1, 1], [], []>} : vector<2x72xf32>, vector<72x216xf32>, vector<2x216xf32> -> vector<2x216xf32>
    %c0_3 = arith.constant 0 : index
    %c0_4 = arith.constant 0 : index
    %3 = vector.load %arg2[%c0_3, %c0_4] : memref<1x216xf32, #tpu.memory_space<vmem>>, vector<1x216xf32>
    %4 = vector.broadcast %3 : vector<1x216xf32> to vector<2x216xf32>
    %5 = arith.addf %2, %4 : vector<2x216xf32>
    %c0_5 = arith.constant 0 : index
    %c0_6 = arith.constant 0 : index
    %6 = vector.load %arg3[%c0_5, %c0_6] : memref<2x216xf32, #tpu.memory_space<vmem>>, vector<2x216xf32>
    tpu.vector_store %arg3[%c0_5, %c0_6], %5 {strides = array<i32>} : memref<2x216xf32, #tpu.memory_space<vmem>>, vector<2x216xf32>,
    return
  }
}

</mosaic_0001>

<llo_original>
// kernel: tpu_custom_call.1
$region0: #{tpu_custom_call.1}
  #allocation0 [shape = 'u32[]', space=smem, size = 0x4, offset = 0x4, fixed_abs, tag = 'smem constant byte address 0x4 - core index']
  #allocation1 [shape = 'u32[72,128]{1,0:T(1,128)}', space=vmem, size = 0x9000, scoped, tag = 'internal scratch']
  %s0 = inlined_call_operand.hbm [shape: f32[2,72], index: 0, kind: input, shape index: {}]
  %s1 = inlined_call_operand.hbm [shape: f32[72,216], index: 1, kind: input, shape index: {}]
  %s2 = inlined_call_operand.hbm [shape: f32[1,216], index: 2, kind: input, shape index: {}]
  %s3 = inlined_call_operand.hbm [shape: f32[2,216], index: 3, kind: output, shape index: {}]
  %s4 = sld [smem:[#allocation0]]
  $region34: #{tpu_custom_call.1} parent=0
    _
  %s6 = ssub.s32 1, %s4
  %s7 = scalar_select 0, %s6, %s4
  $region1: #{tpu_custom_call.1} parent=0
    #allocation2 [shape = 'u8[1024]{0}', space=vmem, size = 0x400, scoped, tag = 'input window, operand 0, single buffered']
    #allocation3 [shape = 's32[1]{0}', space=sflag, size = 0x4, scoped, tag = 'scoped memory for tpu_custom_call.1']
    #allocation4 [shape = 's32[1]{0}', space=sflag, size = 0x4, scoped, tag = 'scoped memory for tpu_custom_call.1']
    #allocation5 [shape = 'u8[73728]{0}', space=vmem, size = 0x12000, scoped, tag = 'input window, operand 1, single buffered']
    #allocation6 [shape = 's32[1]{0}', space=sflag, size = 0x4, scoped, tag = 'scoped memory for tpu_custom_call.1']
    #allocation7 [shape = 'u8[1024]{0}', space=vmem, size = 0x400, scoped, tag = 'input window, operand 2, single buffered']
    #allocation8 [shape = 'u8[2048]{0}', space=vmem, size = 0x800, scoped, tag = 'output window, operand 0, single buffered']
    %8 = vsyncpa [#allocation3], 0
    %9 = vsyncpa [#allocation6], 0
    %10 = vsyncpa [#allocation4], 0
    // Predicated region
    $region2: #{tpu_custom_call.1} parent=1 // pred_check
      _
    $region3: #{tpu_custom_call.1} parent=1 // pred_check_branch
      %12 = sbr.rel (0) target = $region5
    $region4: #{tpu_custom_call.1} parent=1 // pred_region
      %14 = vsyncadd [#allocation3], 0
      %s16 = sshll.u32 %s0, 4
      %s17 = int_to_ptr.hbm [resolvable:$true] %s16
      %s18 = sshll.u32 [#allocation2], 4
      %s19 = int_to_ptr.vmem [resolvable:$true] %s18
      %21 = dma.hbm_to_vmem [thread:$0]  %s17, 32, %s19, [#allocation3]
    $region5: #{tpu_custom_call.1} parent=1 // pred_fallthru
      _
    // Predicated region
    $region6: #{tpu_custom_call.1} parent=1 // pred_check
      _
    $region7: #{tpu_custom_call.1} parent=1 // pred_check_branch
      %23 = sbr.rel (0) target = $region9
    $region8: #{tpu_custom_call.1} parent=1 // pred_region
      %25 = vsyncadd [#allocation6], 0
      %s26 = sshll.u32 %s1, 4
      %s27 = int_to_ptr.hbm [resolvable:$true] %s26
      %s28 = sshll.u32 [#allocation5], 4
      %s29 = int_to_ptr.vmem [resolvable:$true] %s28
      %34 = dma.hbm_to_vmem [thread:$0]  %s27, 2304, %s29, [#allocation6], 256, 256, 16
    $region9: #{tpu_custom_call.1} parent=1 // pred_fallthru
      _
    // Predicated region
    $region10: #{tpu_custom_call.1} parent=1 // pred_check
      _
    $region11: #{tpu_custom_call.1} parent=1 // pred_check_branch
      %36 = sbr.rel (0) target = $region13
    $region12: #{tpu_custom_call.1} parent=1 // pred_region
      %38 = vsyncadd [#allocation6], 0
      %s40 = sshll.u32 %s2, 4
      %s41 = int_to_ptr.hbm [resolvable:$true] %s40
      %s42 = sshll.u32 [#allocation7], 4
      %s43 = int_to_ptr.vmem [resolvable:$true] %s42
      %45 = dma.hbm_to_vmem [thread:$0]  %s41, 32, %s43, [#allocation6]
    $region13: #{tpu_custom_call.1} parent=1 // pred_fallthru
      _
    // Predicated region
    $region14: #{tpu_custom_call.1} parent=1 // pred_check
      _
    $region15: #{tpu_custom_call.1} parent=1 // pred_check_branch
      %47 = sbr.rel (0) target = $region17
    $region16: #{tpu_custom_call.1} parent=1 // pred_region
      %49 = dma.done [#allocation3], 32
    $region17: #{tpu_custom_call.1} parent=1 // pred_fallthru
      _
    // Predicated region
    $region18: #{tpu_custom_call.1} parent=1 // pred_check
      _
    $region19: #{tpu_custom_call.1} parent=1 // pred_check_branch
      %51 = sbr.rel (0) target = $region21
    $region20: #{tpu_custom_call.1} parent=1 // pred_region
      %53 = dma.done [#allocation6], 2304
    $region21: #{tpu_custom_call.1} parent=1 // pred_fallthru
      _
    // Predicated region
    $region22: #{tpu_custom_call.1} parent=1 // pred_check
      _
    $region23: #{tpu_custom_call.1} parent=1 // pred_check_branch
      %55 = sbr.rel (0) target = $region25
    $region24: #{tpu_custom_call.1} parent=1 // pred_region
      %57 = dma.done [#allocation6], 32
    $region25: #{tpu_custom_call.1} parent=1 // pred_fallthru
      _
    %v58 = vld [vmem:[#allocation2] sm:$0x3]
    %v59 = vld [vmem:[#allocation5] sm:$0xff]
    %v60 = vld [vmem:[#allocation5 + $0x8] sm:$0xff]
    %v61 = vld [vmem:[#allocation5 + $0x10] sm:$0xff]
    %v62 = vld [vmem:[#allocation5 + $0x18] sm:$0xff]
    %v63 = vld [vmem:[#allocation5 + $0x20] sm:$0xff]
    %v64 = vld [vmem:[#allocation5 + $0x28] sm:$0xff]
    %v65 = vld [vmem:[#allocation5 + $0x30] sm:$0xff]
    %v66 = vld [vmem:[#allocation5 + $0x38] sm:$0xff]
    %v67 = vld [vmem:[#allocation5 + $0x40] sm:$0xff]
    %v68 = vld [vmem:[#allocation5 + $0x48] sm:$0xff]
    %v69 = vld [vmem:[#allocation5 + $0x50] sm:$0xff]
    %v70 = vld [vmem:[#allocation5 + $0x58] sm:$0xff]
    %v71 = vld [vmem:[#allocation5 + $0x60] sm:$0xff]
    %v72 = vld [vmem:[#allocation5 + $0x68] sm:$0xff]
    %v73 = vld [vmem:[#allocation5 + $0x70] sm:$0xff]
    %v74 = vld [vmem:[#allocation5 + $0x78] sm:$0xff]
    %v75 = vld [vmem:[#allocation5 + $0x80] sm:$0xff]
    %v76 = vld [vmem:[#allocation5 + $0x88] sm:$0xff]
    %v77 = vld [vmem:[#allocation7] sm:$0x3]
    %v79 = vperm.slane %v77, 0
    %v80 = vperm.slane %v77, 1
    %vm83 = vcmask 588800
    %v85 = vsel %vm83, %v58, 0
    %87 = vmatpush.msra.mxu0 0.0
    %88 = vmatpush.msra.mxu0 0.0
    %89 = vmatpush.msra.mxu0 0.0
    %90 = vmatpush.msra.mxu0 0.0
    %91 = vmatpush.msra.mxu0 0.0
    %92 = vmatpush.msra.mxu0 0.0
    %93 = vmatpush.msra.mxu0 0.0
    %94 = vmatpush.msra.mxu0 %v75
    %95 = vmatpush.msra.mxu0 %v73
    %96 = vmatpush.msra.mxu0 %v71
    %97 = vmatpush.msra.mxu0 %v69
    %98 = vmatpush.msra.mxu0 %v67
    %99 = vmatpush.msra.mxu0 %v65
    %100 = vmatpush.msra.mxu0 %v63
    %101 = vmatpush.msra.mxu0 %v61
    %102 = vmatpush.msra.mxu0 %v59
    %103 = vmatmul.f32.gmra.mxu0 %v85
    %v104 = vpop.f32.mrf.mxu0
    %v105 = vadd.f32 %v79, %v104
    %106 = vdwg.mxu0
    %107 = vmatpush.msra.mxu0 0.0
    %108 = vmatpush.msra.mxu0 0.0
    %109 = vmatpush.msra.mxu0 0.0
    %110 = vmatpush.msra.mxu0 0.0
    %111 = vmatpush.msra.mxu0 0.0
    %112 = vmatpush.msra.mxu0 0.0
    %113 = vmatpush.msra.mxu0 0.0
    %114 = vmatpush.msra.mxu0 %v76
    %115 = vmatpush.msra.mxu0 %v74
    %116 = vmatpush.msra.mxu0 %v72
    %117 = vmatpush.msra.mxu0 %v70
    %118 = vmatpush.msra.mxu0 %v68
    %119 = vmatpush.msra.mxu0 %v66
    %120 = vmatpush.msra.mxu0 %v64
    %121 = vmatpush.msra.mxu0 %v62
    %122 = vmatpush.msra.mxu0 %v60
    %123 = vmatmul.f32.gmra.mxu0 %v85
    %v124 = vpop.f32.mrf.mxu0
    %v125 = vadd.f32 %v80, %v124
    %126 = vdwg.mxu0
    %v129 = vrot.slane %v125, 6
    %vm130 = vcmask 1041408
    %v131 = vsel %vm130, %v105, %v129
    %vm133 = vcmask 715778
    %vm134 = vmor %vm133, %vm130
    %135 = vst.msk [vmem:[#allocation8] sm:$0xf] %vm134, %v131
    // Predicated region
    $region26: #{tpu_custom_call.1} parent=1 // pred_check
      _
    $region27: #{tpu_custom_call.1} parent=1 // pred_check_branch
      %137 = sbr.rel (0) target = $region29
    $region28: #{tpu_custom_call.1} parent=1 // pred_region
      %139 = vsyncadd [#allocation4], 0
      %s141 = sshll.u32 [#allocation8], 4
      %s142 = int_to_ptr.vmem [resolvable:$true] %s141
      %s143 = sshll.u32 %s3, 4
      %s144 = int_to_ptr.hbm [resolvable:$true] %s143
      %146 = dma.vmem_to_hbm [thread:$0]  %s142, 64, %s144, [#allocation4]
    $region29: #{tpu_custom_call.1} parent=1 // pred_fallthru
      _
    // Predicated region
    $region30: #{tpu_custom_call.1} parent=1 // pred_check
      _
    $region31: #{tpu_custom_call.1} parent=1 // pred_check_branch
      %148 = sbr.rel (0) target = $region33
    $region32: #{tpu_custom_call.1} parent=1 // pred_region
      %150 = dma.done [#allocation4], 64
    $region33: #{tpu_custom_call.1} parent=1 // pred_fallthru
      _
    %151 = vsyncpa [#allocation3], 1
    %152 = vsyncpa [#allocation6], 1
    %153 = vsyncpa [#allocation4], 1

</llo_original>
